<compile_context>
chip_gen: v6e
topology: v6e:2x2x1
jax: 0.10.0
libtpu: 0.0.40
codegen_flags: <defaults>
</compile_context>

<pallas_src>
import jax
import jax.numpy as jnp
from jax.experimental import pallas as pl
from jax.experimental.pallas import tpu as pltpu


def pq_kernel(pt_ref, qt_ref, a_ref, x_ref, o_ref):
    # pt_ref, qt_ref : (d, d)     transposed weights, resident across the grid
    # a_ref          : (TB, d, d) this step's batch tile of A
    # x_ref, o_ref   : (TB, d)    dense x / output rows for this tile
    xv = x_ref[...]

    # u[b] = Q @ x[b]  (row form: x[b] @ Q^T; qt_ref already holds Q^T, so we
    # contract on its leading axis -- native MXU layout, no relayout).
    u = jnp.dot(xv, qt_ref[...], preferred_element_type=jnp.float32)   # (TB, d)

    # v[b] = A[b] @ u[b] : streaming batched mat-vec (VPU mul + lane reduce).
    # The cast of a sub-32-bit A folds into the multiply (no whole-tile astype).
    v = jnp.sum(a_ref[...] * u[:, None, :], axis=-1)                   # (TB, d)

    # out[b] = P @ v[b]  (row form: v[b] @ P^T; pt_ref holds P^T).
    out = jnp.dot(v, pt_ref[...], preferred_element_type=jnp.float32)  # (TB, d)

    o_ref[...] = out.astype(o_ref.dtype)


def _vmem_limit_bytes():
    """Generation-aware scoped VMEM limit (~75% of physical)."""
    try:
        physical = int(pltpu.get_tpu_info().vmem_capacity_bytes)
    except Exception:
        physical = 64 * 1024 * 1024          # conservative: v7x per-TC VMEM
    # ~48 MiB on v7x (64 MiB physical), ~96 MiB on v5e/v6e (128 MiB physical);
    # leaves headroom for compiler-internal scratch.
    return min(physical * 3 // 4, 112 * 1024 * 1024)


def _choose_batch_tile(B, d, a_itemsize, a_budget, max_batch_tile=None):
    """Batch elements per grid step.

    Per batch element the pipeline holds ~2 DMA buffers of the A tile plus f32
    temporaries of the A*u product; TB is the largest divisor of B that fits
    the budget (divisor => no padding / no extra HBM traffic).  When B allows,
    prefer >= 4 grid steps (>= 2 per v7x TensorCore) as long as each A tile
    stays >= 2 MiB so the HBM stream keeps large DMAs.
    """
    per_b = d * d * (2 * a_itemsize + 8)
    cap = max(1, a_budget // per_b)
    if max_batch_tile is not None:
        cap = max(1, min(cap, max_batch_tile))
    divs = [t for t in range(1, B + 1) if B % t == 0 and t <= cap]
    tb = max(divs) if divs else 1
    min_tile_bytes = 2 * 1024 * 1024
    if B // tb < 4:
        for t in sorted(divs, reverse=True):
            if B // t >= 4 and t * d * d * a_itemsize >= min_tile_bytes:
                tb = t
                break
    return tb
    # TODO(synk): tile the d (row) axis of A for very large d where even a
    # single (1, d, d) tile exceeds the per-generation VMEM budget.


def pq_model_forward(P, Q, A, x, *, max_batch_tile=None):
    """P, Q: (d, d); A: (B, d, d); x: (B, d) -> (B, d) = P @ A[b] @ Q @ x[b]."""
    B, d, _ = A.shape
    a_itemsize = jnp.dtype(A.dtype).itemsize
    vmem_limit = _vmem_limit_bytes()

    # Reserve room for the resident weights (worst case double-buffered) plus
    # fixed headroom; the rest of the budget streams A.
    reserved = 4 * d * d * 4 + 4 * 1024 * 1024
    a_budget = max(0, vmem_limit - reserved)
    tb = _choose_batch_tile(B, d, a_itemsize, a_budget, max_batch_tile)
    n_steps = B // tb

    # Cheap, O(B*d) metadata-only reshape so x/out blocks are (TB, d) dense
    # (leading grid dim squeezed).  A itself is never reshaped, padded or
    # copied -- it streams from HBM exactly once.
    x3 = x.reshape(n_steps, tb, d)
    # One-time O(d^2) transposes so the kernel contracts on the weights' axis 0.
    Pt = jnp.transpose(P)
    Qt = jnp.transpose(Q)

    cost = pl.CostEstimate(
        flops=6 * B * d * d,
        transcendentals=0,
        bytes_accessed=int(B * d * d * a_itemsize + 2 * d * d * 4
                           + 2 * B * d * jnp.dtype(x.dtype).itemsize),
    )

    def run(single_buffer_weights):
        if single_buffer_weights:
            # P^T / Q^T are resident (same block every step): one buffer each.
            w_specs = [pl.BlockSpec((d, d), lambda b: (0, 0),
                                    pipeline_mode=pl.Buffered(1))
                       for _ in range(2)]
        else:
            w_specs = [pl.BlockSpec((d, d), lambda b: (0, 0))
                       for _ in range(2)]
        return pl.pallas_call(
            pq_kernel,
            out_shape=jax.ShapeDtypeStruct((n_steps, tb, d), x.dtype),
            grid_spec=pltpu.PrefetchScalarGridSpec(
                num_scalar_prefetch=0,
                grid=(n_steps,),
                in_specs=w_specs + [
                    pl.BlockSpec((tb, d, d), lambda b: (b, 0, 0)),    # A tile
                    pl.BlockSpec((None, tb, d), lambda b: (b, 0, 0)),  # x tile
                ],
                out_specs=pl.BlockSpec((None, tb, d), lambda b: (b, 0, 0)),
            ),
            compiler_params=pltpu.CompilerParams(
                dimension_semantics=("parallel",),
                vmem_limit_bytes=vmem_limit),
            cost_estimate=cost,
        )(Pt, Qt, A, x3)

    try:
        out3 = run(True)      # single-buffered resident weights (frees VMEM)
    except Exception:
        out3 = run(False)     # backend rejected Buffered(1): default buffering
    return out3.reshape(B, d)


def _reference(P, Q, A, x):
    mat = jnp.einsum("ij,bjk,kl->bil", P, A, Q)
    return jnp.einsum("bij,bj->bi", mat, x)


if __name__ == "__main__":
    key = jax.random.PRNGKey(0)
    k_q, k_a, k_x = jax.random.split(key, 3)

    B, d, n, c = 2, 32, 20, 2

    # Parameter init mirroring the module's __init__:
    #   P = eye(d); Q = eye(d) + (c / n) * randn(d, d)   (delta_mat is unused)
    P = jnp.eye(d, dtype=jnp.float32)
    Q = jnp.eye(d, dtype=jnp.float32) + (c / n) * jax.random.normal(
        k_q, (d, d), jnp.float32)

    A = jax.random.normal(k_a, (B, d, d), jnp.float32)
    x = jax.random.normal(k_x, (B, d), jnp.float32)

    out = pq_model_forward(P, Q, A, x)
    out = jax.block_until_ready(out)
    out_ref = _reference(P, Q, A, x)
    assert out.shape == (B, d)
    assert jnp.allclose(out, out_ref, atol=1e-3, rtol=1e-3), (
        float(jnp.max(jnp.abs(out - out_ref))))

    # Exercise the multi-step (divisor-tiled, no-pad) path as well: B=6 with a
    # forced tile cap of 3 -> 2 grid steps, TB not a multiple of 8, no padding.
    B2 = 6
    k_a2, k_x2 = jax.random.split(k_a)
    A2 = jax.random.normal(k_a2, (B2, d, d), jnp.float32)
    x2 = jax.random.normal(k_x2, (B2, d), jnp.float32)
    out2 = jax.block_until_ready(
        pq_model_forward(P, Q, A2, x2, max_batch_tile=3))
    out2_ref = _reference(P, Q, A2, x2)
    assert jnp.allclose(out2, out2_ref, atol=1e-3, rtol=1e-3), (
        float(jnp.max(jnp.abs(out2 - out2_ref))))

    print("KERNEL_OK")
</pallas_src>

<mosaic_0001>
module attributes {stable_mosaic.version = 11 : i64} {
  func.func @pq_kernel(%arg0: i32, %arg1: memref<32x32xf32, #tpu.memory_space<vmem>>, %arg2: memref<32x32xf32, #tpu.memory_space<vmem>>, %arg3: memref<2x32x32xf32, #tpu.memory_space<vmem>>, %arg4: memref<1x2x32xf32, #tpu.memory_space<vmem>>, %arg5: memref<1x2x32xf32, #tpu.memory_space<vmem>>) attributes {dimension_semantics = [#tpu.dimension_semantics<parallel>], iteration_bounds = array<i64: 1>, scalar_prefetch = 0 : i64, scratch_operands = 0 : i64, tpu.core_type = #tpu.core_type<tc>, window_params = [{pipeline_mode = #tpu.pipeline_mode<synchronous>, transform_indices = @transform_0, window_bounds = array<i64: 32, 32>}, {pipeline_mode = #tpu.pipeline_mode<synchronous>, transform_indices = @transform_1, window_bounds = array<i64: 32, 32>}, {transform_indices = @transform_2, window_bounds = array<i64: 2, 32, 32>}, {transform_indices = @transform_3, window_bounds = array<i64: 1, 2, 32>}, {transform_indices = @transform_4, window_bounds = array<i64: 1, 2, 32>}]} {
    %c0 = arith.constant 0 : index
    %c0_0 = arith.constant 0 : index
    %c0_1 = arith.constant 0 : index
    %0 = vector.load %arg4[%c0, %c0_0, %c0_1] : memref<1x2x32xf32, #tpu.memory_space<vmem>>, vector<1x2x32xf32>
    %1 = vector.shape_cast %0 : vector<1x2x32xf32> to vector<2x32xf32>
    %c0_2 = arith.constant 0 : index
    %c0_3 = arith.constant 0 : index
    %2 = vector.load %arg2[%c0_2, %c0_3] : memref<32x32xf32, #tpu.memory_space<vmem>>, vector<32x32xf32>
    %cst = arith.constant dense<0.000000e+00> : vector<2x32xf32>
    %3 = tpu.matmul %1, %2, %cst {dimension_numbers = #tpu.dot_dimension_numbers<[1], [0], [0], [1], [0, 0, 1, 1], [], []>} : vector<2x32xf32>, vector<32x32xf32>, vector<2x32xf32> -> vector<2x32xf32>
    %c0_4 = arith.constant 0 : index
    %c0_5 = arith.constant 0 : index
    %c0_6 = arith.constant 0 : index
    %4 = vector.load %arg3[%c0_4, %c0_5, %c0_6] : memref<2x32x32xf32, #tpu.memory_space<vmem>>, vector<2x32x32xf32>
    %5 = vector.shape_cast %3 : vector<2x32xf32> to vector<2x1x32xf32>
    %6 = vector.broadcast %5 : vector<2x1x32xf32> to vector<2x32x32xf32>
    %7 = arith.mulf %4, %6 : vector<2x32x32xf32>
    %cst_7 = arith.constant dense<0.000000e+00> : vector<2x32xf32>
    %8 = vector.multi_reduction <add>, %7, %cst_7 [2] : vector<2x32x32xf32> to vector<2x32xf32>
    %c0_8 = arith.constant 0 : index
    %c0_9 = arith.constant 0 : index
    %9 = vector.load %arg1[%c0_8, %c0_9] : memref<32x32xf32, #tpu.memory_space<vmem>>, vector<32x32xf32>
    %cst_10 = arith.constant dense<0.000000e+00> : vector<2x32xf32>
    %10 = tpu.matmul %8, %9, %cst_10 {dimension_numbers = #tpu.dot_dimension_numbers<[1], [0], [0], [1], [0, 0, 1, 1], [], []>} : vector<2x32xf32>, vector<32x32xf32>, vector<2x32xf32> -> vector<2x32xf32>
    %c0_11 = arith.constant 0 : index
    %c0_12 = arith.constant 0 : index
    %c0_13 = arith.constant 0 : index
    %11 = vector.load %arg5[%c0_11, %c0_12, %c0_13] : memref<1x2x32xf32, #tpu.memory_space<vmem>>, vector<1x2x32xf32>
    %12 = vector.shape_cast %11 : vector<1x2x32xf32> to vector<2x32xf32>
    %13 = vector.shape_cast %10 : vector<2x32xf32> to vector<1x2x32xf32>
    tpu.vector_store %arg5[%c0_11, %c0_12, %c0_13], %13 {strides = array<i32>} : memref<1x2x32xf32, #tpu.memory_space<vmem>>, vector<1x2x32xf32>,
    return
  }
  func.func @transform_0(%arg0: i32) -> (i32, i32) {
    %c0_i32 = arith.constant 0 : i32
    %c0_i32_0 = arith.constant 0 : i32
    %c0_i32_1 = arith.constant 0 : i32
    return %c0_i32, %c0_i32_0 : i32, i32
  }
  func.func @transform_1(%arg0: i32) -> (i32, i32) {
    %c0_i32 = arith.constant 0 : i32
    %c0_i32_0 = arith.constant 0 : i32
    %c0_i32_1 = arith.constant 0 : i32
    return %c0_i32, %c0_i32_0 : i32, i32
  }
  func.func @transform_2(%arg0: i32) -> (i32, i32, i32) {
    %c0_i32 = arith.constant 0 : i32
    %c0_i32_0 = arith.constant 0 : i32
    %c0_i32_1 = arith.constant 0 : i32
    return %arg0, %c0_i32, %c0_i32_0 : i32, i32, i32
  }
  func.func @transform_3(%arg0: i32) -> (i32, i32, i32) {
    %c0_i32 = arith.constant 0 : i32
    %c0_i32_0 = arith.constant 0 : i32
    %c0_i32_1 = arith.constant 0 : i32
    return %arg0, %c0_i32, %c0_i32_0 : i32, i32, i32
  }
  func.func @transform_4(%arg0: i32) -> (i32, i32, i32) {
    %c0_i32 = arith.constant 0 : i32
    %c0_i32_0 = arith.constant 0 : i32
    %c0_i32_1 = arith.constant 0 : i32
    return %arg0, %c0_i32, %c0_i32_0 : i32, i32, i32
  }
}

module attributes {stable_mosaic.version = 11 : i64} {
  func.func @pq_kernel(%arg0: i32, %arg1: memref<32x32xf32, #tpu.memory_space<vmem>>, %arg2: memref<32x32xf32, #tpu.memory_space<vmem>>, %arg3: memref<2x32x32xf32, #tpu.memory_space<vmem>>, %arg4: memref<1x2x32xf32, #tpu.memory_space<vmem>>, %arg5: memref<1x2x32xf32, #tpu.memory_space<vmem>>) attributes {dimension_semantics = [#tpu.dimension_semantics<parallel>], iteration_bounds = array<i64: 1>, scalar_prefetch = 0 : i64, scratch_operands = 0 : i64, tpu.core_type = #tpu.core_type<tc>, window_params = [{pipeline_mode = #tpu.pipeline_mode<synchronous>, transform_indices = @transform_0, window_bounds = array<i64: 32, 32>}, {pipeline_mode = #tpu.pipeline_mode<synchronous>, transform_indices = @transform_1, window_bounds = array<i64: 32, 32>}, {transform_indices = @transform_2, window_bounds = array<i64: 2, 32, 32>}, {transform_indices = @transform_3, window_bounds = array<i64: 1, 2, 32>}, {transform_indices = @transform_4, window_bounds = array<i64: 1, 2, 32>}]} {
    %c0 = arith.constant 0 : index
    %c0_0 = arith.constant 0 : index
    %c0_1 = arith.constant 0 : index
    %0 = vector.load %arg4[%c0, %c0_0, %c0_1] : memref<1x2x32xf32, #tpu.memory_space<vmem>>, vector<1x2x32xf32>
    %1 = vector.shape_cast %0 : vector<1x2x32xf32> to vector<2x32xf32>
    %c0_2 = arith.constant 0 : index
    %c0_3 = arith.constant 0 : index
    %2 = vector.load %arg2[%c0_2, %c0_3] : memref<32x32xf32, #tpu.memory_space<vmem>>, vector<32x32xf32>
    %cst = arith.constant dense<0.000000e+00> : vector<2x32xf32>
    %3 = tpu.matmul %1, %2, %cst {dimension_numbers = #tpu.dot_dimension_numbers<[1], [0], [0], [1], [0, 0, 1, 1], [], []>} : vector<2x32xf32>, vector<32x32xf32>, vector<2x32xf32> -> vector<2x32xf32>
    %c0_4 = arith.constant 0 : index
    %c0_5 = arith.constant 0 : index
    %c0_6 = arith.constant 0 : index
    %4 = vector.load %arg3[%c0_4, %c0_5, %c0_6] : memref<2x32x32xf32, #tpu.memory_space<vmem>>, vector<2x32x32xf32>
    %5 = vector.shape_cast %3 : vector<2x32xf32> to vector<2x1x32xf32>
    %6 = vector.broadcast %5 : vector<2x1x32xf32> to vector<2x32x32xf32>
    %7 = arith.mulf %4, %6 : vector<2x32x32xf32>
    %cst_7 = arith.constant dense<0.000000e+00> : vector<2x32xf32>
    %8 = vector.multi_reduction <add>, %7, %cst_7 [2] : vector<2x32x32xf32> to vector<2x32xf32>
    %c0_8 = arith.constant 0 : index
    %c0_9 = arith.constant 0 : index
    %9 = vector.load %arg1[%c0_8, %c0_9] : memref<32x32xf32, #tpu.memory_space<vmem>>, vector<32x32xf32>
    %cst_10 = arith.constant dense<0.000000e+00> : vector<2x32xf32>
    %10 = tpu.matmul %8, %9, %cst_10 {dimension_numbers = #tpu.dot_dimension_numbers<[1], [0], [0], [1], [0, 0, 1, 1], [], []>} : vector<2x32xf32>, vector<32x32xf32>, vector<2x32xf32> -> vector<2x32xf32>
    %c0_11 = arith.constant 0 : index
    %c0_12 = arith.constant 0 : index
    %c0_13 = arith.constant 0 : index
    %11 = vector.load %arg5[%c0_11, %c0_12, %c0_13] : memref<1x2x32xf32, #tpu.memory_space<vmem>>, vector<1x2x32xf32>
    %12 = vector.shape_cast %11 : vector<1x2x32xf32> to vector<2x32xf32>
    %13 = vector.shape_cast %10 : vector<2x32xf32> to vector<1x2x32xf32>
    tpu.vector_store %arg5[%c0_11, %c0_12, %c0_13], %13 {strides = array<i32>} : memref<1x2x32xf32, #tpu.memory_space<vmem>>, vector<1x2x32xf32>,
    return
  }
  func.func @transform_0(%arg0: i32) -> (i32, i32) {
    %c0_i32 = arith.constant 0 : i32
    %c0_i32_0 = arith.constant 0 : i32
    %c0_i32_1 = arith.constant 0 : i32
    return %c0_i32, %c0_i32_0 : i32, i32
  }
  func.func @transform_1(%arg0: i32) -> (i32, i32) {
    %c0_i32 = arith.constant 0 : i32
    %c0_i32_0 = arith.constant 0 : i32
    %c0_i32_1 = arith.constant 0 : i32
    return %c0_i32, %c0_i32_0 : i32, i32
  }
  func.func @transform_2(%arg0: i32) -> (i32, i32, i32) {
    %c0_i32 = arith.constant 0 : i32
    %c0_i32_0 = arith.constant 0 : i32
    %c0_i32_1 = arith.constant 0 : i32
    return %arg0, %c0_i32, %c0_i32_0 : i32, i32, i32
  }
  func.func @transform_3(%arg0: i32) -> (i32, i32, i32) {
    %c0_i32 = arith.constant 0 : i32
    %c0_i32_0 = arith.constant 0 : i32
    %c0_i32_1 = arith.constant 0 : i32
    return %arg0, %c0_i32, %c0_i32_0 : i32, i32, i32
  }
  func.func @transform_4(%arg0: i32) -> (i32, i32, i32) {
    %c0_i32 = arith.constant 0 : i32
    %c0_i32_0 = arith.constant 0 : i32
    %c0_i32_1 = arith.constant 0 : i32
    return %arg0, %c0_i32, %c0_i32_0 : i32, i32, i32
  }
}

</mosaic_0001>

<llo_original>
// kernel: tpu_custom_call.1
$region0: #{tpu_custom_call.1}
  #allocation0 [shape = 'u32[]', space=smem, size = 0x4, offset = 0x4, fixed_abs, tag = 'smem constant byte address 0x4 - core index']
  #allocation1 [shape = 'u32[144,128]{1,0:T(1,128)}', space=vmem, size = 0x12000, scoped, tag = 'internal scratch']
  %s0 = inlined_call_operand.hbm [shape: f32[32,32], index: 0, kind: input, shape index: {}]
  %s1 = inlined_call_operand.hbm [shape: f32[32,32], index: 1, kind: input, shape index: {}]
  %s2 = inlined_call_operand.hbm [shape: f32[2,32,32], index: 2, kind: input, shape index: {}]
  %s3 = inlined_call_operand.vmem [shape: f32[1,2,32], index: 3, kind: input, shape index: {}]
  %s4 = inlined_call_operand.hbm [shape: f32[1,2,32], index: 4, kind: output, shape index: {}]
  %s5 = sld [smem:[#allocation0]]
  $region38: #{tpu_custom_call.1} parent=0
    _
  %s7 = ssub.s32 1, %s5
  %s8 = scalar_select 0, %s7, %s5
  $region1: #{tpu_custom_call.1} parent=0
    #allocation2 [shape = 'u8[16384]{0}', space=vmem, size = 0x4000, scoped, tag = 'input window, operand 0, single buffered']
    #allocation3 [shape = 's32[1]{0}', space=sflag, size = 0x4, scoped, tag = 'scoped memory for tpu_custom_call.1']
    #allocation4 [shape = 's32[1]{0}', space=sflag, size = 0x4, scoped, tag = 'scoped memory for tpu_custom_call.1']
    #allocation5 [shape = 'u8[16384]{0}', space=vmem, size = 0x4000, scoped, tag = 'input window, operand 1, single buffered']
    #allocation6 [shape = 's32[1]{0}', space=sflag, size = 0x4, scoped, tag = 'scoped memory for tpu_custom_call.1']
    #allocation7 [shape = 'u8[32768]{0}', space=vmem, size = 0x8000, scoped, tag = 'input window, operand 2, single buffered']
    #allocation8 [shape = 'u8[1024]{0}', space=vmem, size = 0x400, scoped, tag = 'output window, operand 0, single buffered']
    %9 = vsyncpa [#allocation3], 0
    %10 = vsyncpa [#allocation6], 0
    %11 = vsyncpa [#allocation4], 0
    // Predicated region
    $region2: #{tpu_custom_call.1} parent=1 // pred_check
      _
    $region3: #{tpu_custom_call.1} parent=1 // pred_check_branch
      %13 = sbr.rel (0) target = $region5
    $region4: #{tpu_custom_call.1} parent=1 // pred_region
      %s15 = ssub.s32 512, 512
      %16 = vsyncadd [#allocation3], %s15
      %s17 = sshll.u32 [#allocation2], 4
      %s18 = int_to_ptr.vmem [resolvable:$true] %s17
      %23 = dma.hbm_to_vmem [thread:$0]  %s0, 512, %s18, [#allocation3], 128, 128, 8
    $region5: #{tpu_custom_call.1} parent=1 // pred_fallthru
      _
    // Predicated region
    $region6: #{tpu_custom_call.1} parent=1 // pred_check
      _
    $region7: #{tpu_custom_call.1} parent=1 // pred_check_branch
      %25 = sbr.rel (0) target = $region9
    $region8: #{tpu_custom_call.1} parent=1 // pred_region
      %s27 = ssub.s32 512, 512
      %28 = vsyncadd [#allocation6], %s27
      %s29 = sshll.u32 [#allocation5], 4
      %s30 = int_to_ptr.vmem [resolvable:$true] %s29
      %35 = dma.hbm_to_vmem [thread:$0]  %s1, 512, %s30, [#allocation6], 128, 128, 8
    $region9: #{tpu_custom_call.1} parent=1 // pred_fallthru
      _
    // Predicated region
    $region10: #{tpu_custom_call.1} parent=1 // pred_check
      _
    $region11: #{tpu_custom_call.1} parent=1 // pred_check_branch
      %37 = sbr.rel (0) target = $region13
    $region12: #{tpu_custom_call.1} parent=1 // pred_region
      %s39 = ssub.s32 1024, 1024
      %40 = vsyncadd [#allocation6], %s39
      %s41 = sshll.u32 [#allocation7], 4
      %s42 = int_to_ptr.vmem [resolvable:$true] %s41
      %47 = dma.hbm_to_vmem [thread:$0]  %s2, 1024, %s42, [#allocation6], 128, 128, 8
    $region13: #{tpu_custom_call.1} parent=1 // pred_fallthru
      _
    // Predicated region
    $region14: #{tpu_custom_call.1} parent=1 // pred_check
      _
    $region15: #{tpu_custom_call.1} parent=1 // pred_check_branch
      %49 = sbr.rel (0) target = $region17
    $region16: #{tpu_custom_call.1} parent=1 // pred_region
      _
    $region17: #{tpu_custom_call.1} parent=1 // pred_fallthru
      _
    // Predicated region
    $region18: #{tpu_custom_call.1} parent=1 // pred_check
      _
    $region19: #{tpu_custom_call.1} parent=1 // pred_check_branch
      %51 = sbr.rel (0) target = $region21
    $region20: #{tpu_custom_call.1} parent=1 // pred_region
      %52 = dma.done [#allocation3], 512
    $region21: #{tpu_custom_call.1} parent=1 // pred_fallthru
      _
    // Predicated region
    $region22: #{tpu_custom_call.1} parent=1 // pred_check
      _
    $region23: #{tpu_custom_call.1} parent=1 // pred_check_branch
      %54 = sbr.rel (0) target = $region25
    $region24: #{tpu_custom_call.1} parent=1 // pred_region
      %55 = dma.done [#allocation6], 512
    $region25: #{tpu_custom_call.1} parent=1 // pred_fallthru
      _
    // Predicated region
    $region26: #{tpu_custom_call.1} parent=1 // pred_check
      _
    $region27: #{tpu_custom_call.1} parent=1 // pred_check_branch
      %57 = sbr.rel (0) target = $region29
    $region28: #{tpu_custom_call.1} parent=1 // pred_region
      %58 = dma.done [#allocation6], 1024
    $region29: #{tpu_custom_call.1} parent=1 // pred_fallthru
      _
    %v59 = vld [vmem:[%s3] sm:$0x3]
    %v60 = vld [vmem:[#allocation5] sm:$0xff]
    %v61 = vld [vmem:[#allocation5 + $0x8] sm:$0xff]
    %v62 = vld [vmem:[#allocation5 + $0x10] sm:$0xff]
    %v63 = vld [vmem:[#allocation5 + $0x18] sm:$0xff]
    %vm64 = vcmask 261120
    %v66 = vsel %vm64, %v59, 0
    %68 = vmatprep.subr.mxu0 0.0
    %69 = vmatpush1.msra.mxu0 0.0
    %70 = vmatprep.subr.mxu0 0.0
    %71 = vmatpush1.msra.mxu0 0.0
    %72 = vmatprep.subr.mxu0 0.0
    %73 = vmatpush1.msra.mxu0 0.0
    %74 = vmatprep.subr.mxu0 0.0
    %75 = vmatpush1.msra.mxu0 0.0
    %76 = vmatprep.subr.mxu0 0.0
    %77 = vmatpush1.msra.mxu0 0.0
    %78 = vmatprep.subr.mxu0 0.0
    %79 = vmatpush1.msra.mxu0 0.0
    %80 = vmatprep.subr.mxu0 0.0
    %81 = vmatpush1.msra.mxu0 0.0
    %82 = vmatprep.subr.mxu0 0.0
    %83 = vmatpush1.msra.mxu0 0.0
    %84 = vmatprep.subr.mxu0 0.0
    %85 = vmatpush1.msra.mxu0 0.0
    %86 = vmatprep.subr.mxu0 0.0
    %87 = vmatpush1.msra.mxu0 0.0
    %88 = vmatprep.subr.mxu0 0.0
    %89 = vmatpush1.msra.mxu0 0.0
    %90 = vmatprep.subr.mxu0 0.0
    %91 = vmatpush1.msra.mxu0 0.0
    %92 = vmatprep.subr.mxu0 0.0
    %93 = vmatpush1.msra.mxu0 %v63
    %94 = vmatprep.subr.mxu0 0.0
    %95 = vmatpush1.msra.mxu0 %v62
    %96 = vmatprep.subr.mxu0 0.0
    %97 = vmatpush1.msra.mxu0 %v61
    %98 = vmatprep.subr.mxu0 0.0
    %99 = vmatpush1.msra.mxu0 %v60
    %100 = vmatprep.subr.mxu0 0.0
    %101 = vmatpush2.msra.mxu0 0.0
    %102 = vmatprep.subr.mxu0 0.0
    %103 = vmatpush2.msra.mxu0 0.0
    %104 = vmatprep.subr.mxu0 0.0
    %105 = vmatpush2.msra.mxu0 0.0
    %106 = vmatprep.subr.mxu0 0.0
    %107 = vmatpush2.msra.mxu0 0.0
    %108 = vmatprep.subr.mxu0 0.0
    %109 = vmatpush2.msra.mxu0 0.0
    %110 = vmatprep.subr.mxu0 0.0
    %111 = vmatpush2.msra.mxu0 0.0
    %112 = vmatprep.subr.mxu0 0.0
    %113 = vmatpush2.msra.mxu0 0.0
    %114 = vmatprep.subr.mxu0 0.0
    %115 = vmatpush2.msra.mxu0 0.0
    %116 = vmatprep.subr.mxu0 0.0
    %117 = vmatpush2.msra.mxu0 0.0
    %118 = vmatprep.subr.mxu0 0.0
    %119 = vmatpush2.msra.mxu0 0.0
    %120 = vmatprep.subr.mxu0 0.0
    %121 = vmatpush2.msra.mxu0 0.0
    %122 = vmatprep.subr.mxu0 0.0
    %123 = vmatpush2.msra.mxu0 0.0
    %124 = vmatprep.subr.mxu0 0.0
    %125 = vmatpush2.msra.mxu0 0.0
    %126 = vmatprep.subr.mxu0 0.0
    %127 = vmatpush2.msra.mxu0 0.0
    %128 = vmatprep.subr.mxu0 0.0
    %129 = vmatpush2.msra.mxu0 0.0
    %130 = vmatprep.subr.mxu0 0.0
    %131 = vmatpush2.msra.mxu0 0.0
    %132 = vmatprep.mubr.f32.mxu0 0.0
    %133 = vmatmul.mubr.f32.gmra.mxu0 %v66
    %v134 = vpop.f32.mrf.mxu0
    %v135 = vadd.f32 0.0, %v134
    %v136 = vpop.f32.mrf.mxu0
    %137 = vdwg.mxu0
    %v138 = vld [vmem:[#allocation7] sm:$0xff]
    %v139 = vld [vmem:[#allocation7 + $0x8] sm:$0xff]
    %v140 = vld [vmem:[#allocation7 + $0x10] sm:$0xff]
    %v141 = vld [vmem:[#allocation7 + $0x18] sm:$0xff]
    %v142 = vld [vmem:[#allocation7 + $0x20] sm:$0xff]
    %v143 = vld [vmem:[#allocation7 + $0x28] sm:$0xff]
    %v144 = vld [vmem:[#allocation7 + $0x30] sm:$0xff]
    %v145 = vld [vmem:[#allocation7 + $0x38] sm:$0xff]
    %v148 = vunpack.c.l.s4 1966171168
    %v149 = vunpack.c.0.s8 %v148
    %v150 = vlaneseq
    %v151 = vshrl.u32 %v150, 7
    %v152 = vsub.s32 %v149, %v151
    %v153 = vrot.slane %v135, %v152
    %v154 = vcombine.high %v153, %v153
    %v156 = vunpack.c.l.s4 1966171168
    %v157 = vunpack.c.0.s8 %v156
    %v158 = vlaneseq
    %v159 = vshrl.u32 %v158, 7
    %v160 = vsub.s32 %v157, %v159
    %v161 = vrot.slane %v153, %v160
    %v163 = vunpack.c.l.s4 1966171168
    %v164 = vunpack.c.0.s8 %v163
    %v165 = vlaneseq
    %v166 = vshrl.u32 %v165, 7
    %v167 = vsub.s32 %v164, %v166
    %v168 = vrot.slane %v154, %v167
    %v169 = vlaneseq
    %v170 = vshrl.u32 %v169, 7
    %v171 = vsub.s32 0, %v170
    %v172 = vrot.slane %v161, %v171
    %v173 = vlaneseq
    %v174 = vshrl.u32 %v173, 7
    %v175 = vsub.s32 0, %v174
    %v176 = vrot.slane %v168, %v175
    %v179 = vmul.f32 %v138, %v172
    %v180 = vmul.f32 %v139, %v172
    %v181 = vmul.f32 %v140, %v172
    %v182 = vmul.f32 %v141, %v172
    %v183 = vmul.f32 %v142, %v176
    %v184 = vmul.f32 %v143, %v176
    %v185 = vmul.f32 %v144, %v176
    %v186 = vmul.f32 %v145, %v176
    %v187 = vsel %vm64, %v179, 0.0
    %188 = vadd.xlane.f32.xlu0 %v187
    %v189 = vpop.xlane.xlu0 %188
    %v190 = vsel %vm64, %v180, 0.0
    %191 = vadd.xlane.f32.xlu0 %v190
    %v192 = vpop.xlane.xlu0 %191
    %v193 = vsel %vm64, %v181, 0.0
    %194 = vadd.xlane.f32.xlu0 %v193
    %v195 = vpop.xlane.xlu0 %194
    %v196 = vsel %vm64, %v182, 0.0
    %197 = vadd.xlane.f32.xlu0 %v196
    %v198 = vpop.xlane.xlu0 %197
    %v199 = vsel %vm64, %v183, 0.0
    %200 = vadd.xlane.f32.xlu0 %v199
    %v201 = vpop.xlane.xlu0 %200
    %v202 = vsel %vm64, %v184, 0.0
    %203 = vadd.xlane.f32.xlu0 %v202
    %v204 = vpop.xlane.xlu0 %203
    %v205 = vsel %vm64, %v185, 0.0
    %206 = vadd.xlane.f32.xlu0 %v205
    %v207 = vpop.xlane.xlu0 %206
    %v208 = vsel %vm64, %v186, 0.0
    %209 = vadd.xlane.f32.xlu0 %v208
    %v210 = vpop.xlane.xlu0 %209
    %v211 = vld [vmem:[#allocation2] sm:$0xff]
    %v212 = vld [vmem:[#allocation2 + $0x8] sm:$0xff]
    %v213 = vld [vmem:[#allocation2 + $0x10] sm:$0xff]
    %v214 = vld [vmem:[#allocation2 + $0x18] sm:$0xff]
    %v223 = vlaneseq
    %v224 = vand.u32 %v223, 127
    %v225 = vlaneseq
    %v226 = vshrl.u32 %v225, 7
    %v227 = vsub.s32 %v224, %v226
    %v228 = vrot.slane %v189, %v227
    %v229 = vadd.s32 %v224, 4294967288
    %v230 = vlaneseq
    %v231 = vshrl.u32 %v230, 7
    %v232 = vsub.s32 %v229, %v231
    %v233 = vrot.slane %v192, %v232
    %vm234 = vcmask 130112
    %v235 = vsel %vm234, %v233, %v228
    %v236 = vadd.s32 %v224, 4294967280
    %v237 = vlaneseq
    %v238 = vshrl.u32 %v237, 7
    %v239 = vsub.s32 %v236, %v238
    %v240 = vrot.slane %v195, %v239
    %vm241 = vcmask 195712
    %v242 = vsel %vm241, %v240, %v235
    %v243 = vadd.s32 %v224, 4294967272
    %v244 = vlaneseq
    %v245 = vshrl.u32 %v244, 7
    %v246 = vsub.s32 %v243, %v245
    %v247 = vrot.slane %v198, %v246
    %vm248 = vcmask 261312
    %v249 = vsel %vm248, %v247, %v242
    %v250 = vlaneseq
    %v251 = vshrl.u32 %v250, 7
    %v252 = vsub.s32 %v224, %v251
    %v253 = vrot.slane %v201, %v252
    %v254 = vlaneseq
    %v255 = vshrl.u32 %v254, 7
    %v256 = vsub.s32 %v229, %v255
    %v257 = vrot.slane %v204, %v256
    %v258 = vsel %vm234, %v257, %v253
    %v259 = vlaneseq
    %v260 = vshrl.u32 %v259, 7
    %v261 = vsub.s32 %v236, %v260
    %v262 = vrot.slane %v207, %v261
    %v263 = vsel %vm241, %v262, %v258
    %v264 = vlaneseq
    %v265 = vshrl.u32 %v264, 7
    %v266 = vsub.s32 %v243, %v265
    %v267 = vrot.slane %v210, %v266
    %v268 = vsel %vm248, %v267, %v263
    %vm269 = vcmask 1041409
    %v270 = vsel %vm269, %v268, %v249
    %v271 = vsel %vm64, %v270, 0
    %273 = vmatprep.subr.mxu0 0.0
    %274 = vmatpush1.msra.mxu0 0.0
    %275 = vmatprep.subr.mxu0 0.0
    %276 = vmatpush1.msra.mxu0 0.0
    %277 = vmatprep.subr.mxu0 0.0
    %278 = vmatpush1.msra.mxu0 0.0
    %279 = vmatprep.subr.mxu0 0.0
    %280 = vmatpush1.msra.mxu0 0.0
    %281 = vmatprep.subr.mxu0 0.0
    %282 = vmatpush1.msra.mxu0 0.0
    %283 = vmatprep.subr.mxu0 0.0
    %284 = vmatpush1.msra.mxu0 0.0
    %285 = vmatprep.subr.mxu0 0.0
    %286 = vmatpush1.msra.mxu0 0.0
    %287 = vmatprep.subr.mxu0 0.0
    %288 = vmatpush1.msra.mxu0 0.0
    %289 = vmatprep.subr.mxu0 0.0
    %290 = vmatpush1.msra.mxu0 0.0
    %291 = vmatprep.subr.mxu0 0.0
    %292 = vmatpush1.msra.mxu0 0.0
    %293 = vmatprep.subr.mxu0 0.0
    %294 = vmatpush1.msra.mxu0 0.0
    %295 = vmatprep.subr.mxu0 0.0
    %296 = vmatpush1.msra.mxu0 0.0
    %297 = vmatprep.subr.mxu0 0.0
    %298 = vmatpush1.msra.mxu0 %v214
    %299 = vmatprep.subr.mxu0 0.0
    %300 = vmatpush1.msra.mxu0 %v213
    %301 = vmatprep.subr.mxu0 0.0
    %302 = vmatpush1.msra.mxu0 %v212
    %303 = vmatprep.subr.mxu0 0.0
    %304 = vmatpush1.msra.mxu0 %v211
    %305 = vmatprep.subr.mxu0 0.0
    %306 = vmatpush2.msra.mxu0 0.0
    %307 = vmatprep.subr.mxu0 0.0
    %308 = vmatpush2.msra.mxu0 0.0
    %309 = vmatprep.subr.mxu0 0.0
    %310 = vmatpush2.msra.mxu0 0.0
    %311 = vmatprep.subr.mxu0 0.0
    %312 = vmatpush2.msra.mxu0 0.0
    %313 = vmatprep.subr.mxu0 0.0
    %314 = vmatpush2.msra.mxu0 0.0
    %315 = vmatprep.subr.mxu0 0.0
    %316 = vmatpush2.msra.mxu0 0.0
    %317 = vmatprep.subr.mxu0 0.0
    %318 = vmatpush2.msra.mxu0 0.0
    %319 = vmatprep.subr.mxu0 0.0
    %320 = vmatpush2.msra.mxu0 0.0
    %321 = vmatprep.subr.mxu0 0.0
    %322 = vmatpush2.msra.mxu0 0.0
    %323 = vmatprep.subr.mxu0 0.0
    %324 = vmatpush2.msra.mxu0 0.0
    %325 = vmatprep.subr.mxu0 0.0
    %326 = vmatpush2.msra.mxu0 0.0
    %327 = vmatprep.subr.mxu0 0.0
    %328 = vmatpush2.msra.mxu0 0.0
    %329 = vmatprep.subr.mxu0 0.0
    %330 = vmatpush2.msra.mxu0 0.0
    %331 = vmatprep.subr.mxu0 0.0
    %332 = vmatpush2.msra.mxu0 0.0
    %333 = vmatprep.subr.mxu0 0.0
    %334 = vmatpush2.msra.mxu0 0.0
    %335 = vmatprep.subr.mxu0 0.0
    %336 = vmatpush2.msra.mxu0 0.0
    %337 = vmatprep.mubr.f32.mxu0 0.0
    %338 = vmatmul.mubr.f32.gmra.mxu0 %v271
    %v339 = vpop.f32.mrf.mxu0
    %v340 = vadd.f32 0.0, %v339
    %v341 = vpop.f32.mrf.mxu0
    %342 = vdwg.mxu0
    %vm343 = vcmask 254976
    %344 = vst.msk [vmem:[#allocation8] sm:$0x3] %vm343, %v340
    // Predicated region
    $region30: #{tpu_custom_call.1} parent=1 // pred_check
      _
    $region31: #{tpu_custom_call.1} parent=1 // pred_check_branch
      %346 = sbr.rel (0) target = $region33
    $region32: #{tpu_custom_call.1} parent=1 // pred_region
      %s348 = ssub.s32 32, 32
      %349 = vsyncadd [#allocation4], %s348
      %s351 = sshll.u32 [#allocation8], 4
      %s352 = int_to_ptr.vmem [resolvable:$true] %s351
      %354 = dma.vmem_to_hbm [thread:$0]  %s352, 32, %s4, [#allocation4]
    $region33: #{tpu_custom_call.1} parent=1 // pred_fallthru
      _
    // Predicated region
    $region34: #{tpu_custom_call.1} parent=1 // pred_check
      _
    $region35: #{tpu_custom_call.1} parent=1 // pred_check_branch
      %356 = sbr.rel (0) target = $region37
    $region36: #{tpu_custom_call.1} parent=1 // pred_region
      %357 = dma.done [#allocation4], 32
    $region37: #{tpu_custom_call.1} parent=1 // pred_fallthru
      _
    %358 = vsyncpa [#allocation3], 1
    %359 = vsyncpa [#allocation6], 1
    %360 = vsyncpa [#allocation4], 1

// kernel: tpu_custom_call.1
$region0: #{tpu_custom_call.1}
  #allocation0 [shape = 'u32[]', space=smem, size = 0x4, offset = 0x4, fixed_abs, tag = 'smem constant byte address 0x4 - core index']
  #allocation1 [shape = 'u32[144,128]{1,0:T(1,128)}', space=vmem, size = 0x12000, scoped, tag = 'internal scratch']
  %s0 = inlined_call_operand.hbm [shape: f32[32,32], index: 0, kind: input, shape index: {}]
  %s1 = inlined_call_operand.hbm [shape: f32[32,32], index: 1, kind: input, shape index: {}]
  %s2 = inlined_call_operand.hbm [shape: f32[2,32,32], index: 2, kind: input, shape index: {}]
  %s3 = inlined_call_operand.vmem [shape: f32[1,2,32], index: 3, kind: input, shape index: {}]
  %s4 = inlined_call_operand.hbm [shape: f32[1,2,32], index: 4, kind: output, shape index: {}]
  %s5 = sld [smem:[#allocation0]]
  $region38: #{tpu_custom_call.1} parent=0
    _
  %s7 = ssub.s32 1, %s5
  %s8 = scalar_select 0, %s7, %s5
  $region1: #{tpu_custom_call.1} parent=0
    #allocation2 [shape = 'u8[16384]{0}', space=vmem, size = 0x4000, scoped, tag = 'input window, operand 0, single buffered']
    #allocation3 [shape = 's32[1]{0}', space=sflag, size = 0x4, scoped, tag = 'scoped memory for tpu_custom_call.1']
    #allocation4 [shape = 's32[1]{0}', space=sflag, size = 0x4, scoped, tag = 'scoped memory for tpu_custom_call.1']
    #allocation5 [shape = 'u8[16384]{0}', space=vmem, size = 0x4000, scoped, tag = 'input window, operand 1, single buffered']
    #allocation6 [shape = 's32[1]{0}', space=sflag, size = 0x4, scoped, tag = 'scoped memory for tpu_custom_call.1']
    #allocation7 [shape = 'u8[32768]{0}', space=vmem, size = 0x8000, scoped, tag = 'input window, operand 2, single buffered']
    #allocation8 [shape = 'u8[1024]{0}', space=vmem, size = 0x400, scoped, tag = 'output window, operand 0, single buffered']
    %9 = vsyncpa [#allocation3], 0
    %10 = vsyncpa [#allocation6], 0
    %11 = vsyncpa [#allocation4], 0
    // Predicated region
    $region2: #{tpu_custom_call.1} parent=1 // pred_check
      _
    $region3: #{tpu_custom_call.1} parent=1 // pred_check_branch
      %13 = sbr.rel (0) target = $region5
    $region4: #{tpu_custom_call.1} parent=1 // pred_region
      %s15 = ssub.s32 512, 512
      %16 = vsyncadd [#allocation3], %s15
      %s17 = sshll.u32 [#allocation2], 4
      %s18 = int_to_ptr.vmem [resolvable:$true] %s17
      %23 = dma.hbm_to_vmem [thread:$0]  %s0, 512, %s18, [#allocation3], 128, 128, 8
    $region5: #{tpu_custom_call.1} parent=1 // pred_fallthru
      _
    // Predicated region
    $region6: #{tpu_custom_call.1} parent=1 // pred_check
      _
    $region7: #{tpu_custom_call.1} parent=1 // pred_check_branch
      %25 = sbr.rel (0) target = $region9
    $region8: #{tpu_custom_call.1} parent=1 // pred_region
      %s27 = ssub.s32 512, 512
      %28 = vsyncadd [#allocation6], %s27
      %s29 = sshll.u32 [#allocation5], 4
      %s30 = int_to_ptr.vmem [resolvable:$true] %s29
      %35 = dma.hbm_to_vmem [thread:$0]  %s1, 512, %s30, [#allocation6], 128, 128, 8
    $region9: #{tpu_custom_call.1} parent=1 // pred_fallthru
      _
    // Predicated region
    $region10: #{tpu_custom_call.1} parent=1 // pred_check
      _
    $region11: #{tpu_custom_call.1} parent=1 // pred_check_branch
      %37 = sbr.rel (0) target = $region13
    $region12: #{tpu_custom_call.1} parent=1 // pred_region
      %s39 = ssub.s32 1024, 1024
      %40 = vsyncadd [#allocation6], %s39
      %s41 = sshll.u32 [#allocation7], 4
      %s42 = int_to_ptr.vmem [resolvable:$true] %s41
      %47 = dma.hbm_to_vmem [thread:$0]  %s2, 1024, %s42, [#allocation6], 128, 128, 8
    $region13: #{tpu_custom_call.1} parent=1 // pred_fallthru
      _
    // Predicated region
    $region14: #{tpu_custom_call.1} parent=1 // pred_check
      _
    $region15: #{tpu_custom_call.1} parent=1 // pred_check_branch
      %49 = sbr.rel (0) target = $region17
    $region16: #{tpu_custom_call.1} parent=1 // pred_region
      _
    $region17: #{tpu_custom_call.1} parent=1 // pred_fallthru
      _
    // Predicated region
    $region18: #{tpu_custom_call.1} parent=1 // pred_check
      _
    $region19: #{tpu_custom_call.1} parent=1 // pred_check_branch
      %51 = sbr.rel (0) target = $region21
    $region20: #{tpu_custom_call.1} parent=1 // pred_region
      %52 = dma.done [#allocation3], 512
    $region21: #{tpu_custom_call.1} parent=1 // pred_fallthru
      _
    // Predicated region
    $region22: #{tpu_custom_call.1} parent=1 // pred_check
      _
    $region23: #{tpu_custom_call.1} parent=1 // pred_check_branch
      %54 = sbr.rel (0) target = $region25
    $region24: #{tpu_custom_call.1} parent=1 // pred_region
      %55 = dma.done [#allocation6], 512
    $region25: #{tpu_custom_call.1} parent=1 // pred_fallthru
      _
    // Predicated region
    $region26: #{tpu_custom_call.1} parent=1 // pred_check
      _
    $region27: #{tpu_custom_call.1} parent=1 // pred_check_branch
      %57 = sbr.rel (0) target = $region29
    $region28: #{tpu_custom_call.1} parent=1 // pred_region
      %58 = dma.done [#allocation6], 1024
    $region29: #{tpu_custom_call.1} parent=1 // pred_fallthru
      _
    %v59 = vld [vmem:[%s3] sm:$0x3]
    %v60 = vld [vmem:[#allocation5] sm:$0xff]
    %v61 = vld [vmem:[#allocation5 + $0x8] sm:$0xff]
    %v62 = vld [vmem:[#allocation5 + $0x10] sm:$0xff]
    %v63 = vld [vmem:[#allocation5 + $0x18] sm:$0xff]
    %vm64 = vcmask 261120
    %v66 = vsel %vm64, %v59, 0
    %68 = vmatprep.subr.mxu0 0.0
    %69 = vmatpush1.msra.mxu0 0.0
    %70 = vmatprep.subr.mxu0 0.0
    %71 = vmatpush1.msra.mxu0 0.0
    %72 = vmatprep.subr.mxu0 0.0
    %73 = vmatpush1.msra.mxu0 0.0
    %74 = vmatprep.subr.mxu0 0.0
    %75 = vmatpush1.msra.mxu0 0.0
    %76 = vmatprep.subr.mxu0 0.0
    %77 = vmatpush1.msra.mxu0 0.0
    %78 = vmatprep.subr.mxu0 0.0
    %79 = vmatpush1.msra.mxu0 0.0
    %80 = vmatprep.subr.mxu0 0.0
    %81 = vmatpush1.msra.mxu0 0.0
    %82 = vmatprep.subr.mxu0 0.0
    %83 = vmatpush1.msra.mxu0 0.0
    %84 = vmatprep.subr.mxu0 0.0
    %85 = vmatpush1.msra.mxu0 0.0
    %86 = vmatprep.subr.mxu0 0.0
    %87 = vmatpush1.msra.mxu0 0.0
    %88 = vmatprep.subr.mxu0 0.0
    %89 = vmatpush1.msra.mxu0 0.0
    %90 = vmatprep.subr.mxu0 0.0
    %91 = vmatpush1.msra.mxu0 0.0
    %92 = vmatprep.subr.mxu0 0.0
    %93 = vmatpush1.msra.mxu0 %v63
    %94 = vmatprep.subr.mxu0 0.0
    %95 = vmatpush1.msra.mxu0 %v62
    %96 = vmatprep.subr.mxu0 0.0
    %97 = vmatpush1.msra.mxu0 %v61
    %98 = vmatprep.subr.mxu0 0.0
    %99 = vmatpush1.msra.mxu0 %v60
    %100 = vmatprep.subr.mxu0 0.0
    %101 = vmatpush2.msra.mxu0 0.0
    %102 = vmatprep.subr.mxu0 0.0
    %103 = vmatpush2.msra.mxu0 0.0
    %104 = vmatprep.subr.mxu0 0.0
    %105 = vmatpush2.msra.mxu0 0.0
    %106 = vmatprep.subr.mxu0 0.0
    %107 = vmatpush2.msra.mxu0 0.0
    %108 = vmatprep.subr.mxu0 0.0
    %109 = vmatpush2.msra.mxu0 0.0
    %110 = vmatprep.subr.mxu0 0.0
    %111 = vmatpush2.msra.mxu0 0.0
    %112 = vmatprep.subr.mxu0 0.0
    %113 = vmatpush2.msra.mxu0 0.0
    %114 = vmatprep.subr.mxu0 0.0
    %115 = vmatpush2.msra.mxu0 0.0
    %116 = vmatprep.subr.mxu0 0.0
    %117 = vmatpush2.msra.mxu0 0.0
    %118 = vmatprep.subr.mxu0 0.0
    %119 = vmatpush2.msra.mxu0 0.0
    %120 = vmatprep.subr.mxu0 0.0
    %121 = vmatpush2.msra.mxu0 0.0
    %122 = vmatprep.subr.mxu0 0.0
    %123 = vmatpush2.msra.mxu0 0.0
    %124 = vmatprep.subr.mxu0 0.0
    %125 = vmatpush2.msra.mxu0 0.0
    %126 = vmatprep.subr.mxu0 0.0
    %127 = vmatpush2.msra.mxu0 0.0
    %128 = vmatprep.subr.mxu0 0.0
    %129 = vmatpush2.msra.mxu0 0.0
    %130 = vmatprep.subr.mxu0 0.0
    %131 = vmatpush2.msra.mxu0 0.0
    %132 = vmatprep.mubr.f32.mxu0 0.0
    %133 = vmatmul.mubr.f32.gmra.mxu0 %v66
    %v134 = vpop.f32.mrf.mxu0
    %v135 = vadd.f32 0.0, %v134
    %v136 = vpop.f32.mrf.mxu0
    %137 = vdwg.mxu0
    %v138 = vld [vmem:[#allocation7] sm:$0xff]
    %v139 = vld [vmem:[#allocation7 + $0x8] sm:$0xff]
    %v140 = vld [vmem:[#allocation7 + $0x10] sm:$0xff]
    %v141 = vld [vmem:[#allocation7 + $0x18] sm:$0xff]
    %v142 = vld [vmem:[#allocation7 + $0x20] sm:$0xff]
    %v143 = vld [vmem:[#allocation7 + $0x28] sm:$0xff]
    %v144 = vld [vmem:[#allocation7 + $0x30] sm:$0xff]
    %v145 = vld [vmem:[#allocation7 + $0x38] sm:$0xff]
    %v148 = vunpack.c.l.s4 1966171168
    %v149 = vunpack.c.0.s8 %v148
    %v150 = vlaneseq
    %v151 = vshrl.u32 %v150, 7
    %v152 = vsub.s32 %v149, %v151
    %v153 = vrot.slane %v135, %v152
    %v154 = vcombine.high %v153, %v153
    %v156 = vunpack.c.l.s4 1966171168
    %v157 = vunpack.c.0.s8 %v156
    %v158 = vlaneseq
    %v159 = vshrl.u32 %v158, 7
    %v160 = vsub.s32 %v157, %v159
    %v161 = vrot.slane %v153, %v160
    %v163 = vunpack.c.l.s4 1966171168
    %v164 = vunpack.c.0.s8 %v163
    %v165 = vlaneseq
    %v166 = vshrl.u32 %v165, 7
    %v167 = vsub.s32 %v164, %v166
    %v168 = vrot.slane %v154, %v167
    %v169 = vlaneseq
    %v170 = vshrl.u32 %v169, 7
    %v171 = vsub.s32 0, %v170
    %v172 = vrot.slane %v161, %v171
    %v173 = vlaneseq
    %v174 = vshrl.u32 %v173, 7
    %v175 = vsub.s32 0, %v174
    %v176 = vrot.slane %v168, %v175
    %v179 = vmul.f32 %v138, %v172
    %v180 = vmul.f32 %v139, %v172
    %v181 = vmul.f32 %v140, %v172
    %v182 = vmul.f32 %v141, %v172
    %v183 = vmul.f32 %v142, %v176
    %v184 = vmul.f32 %v143, %v176
    %v185 = vmul.f32 %v144, %v176
    %v186 = vmul.f32 %v145, %v176
    %v187 = vsel %vm64, %v179, 0.0
    %188 = vadd.xlane.f32.xlu0 %v187
    %v189 = vpop.xlane.xlu0 %188
    %v190 = vsel %vm64, %v180, 0.0
    %191 = vadd.xlane.f32.xlu0 %v190
    %v192 = vpop.xlane.xlu0 %191
    %v193 = vsel %vm64, %v181, 0.0
    %194 = vadd.xlane.f32.xlu0 %v193
    %v195 = vpop.xlane.xlu0 %194
    %v196 = vsel %vm64, %v182, 0.0
    %197 = vadd.xlane.f32.xlu0 %v196
    %v198 = vpop.xlane.xlu0 %197
    %v199 = vsel %vm64, %v183, 0.0
    %200 = vadd.xlane.f32.xlu0 %v199
    %v201 = vpop.xlane.xlu0 %200
    %v202 = vsel %vm64, %v184, 0.0
    %203 = vadd.xlane.f32.xlu0 %v202
    %v204 = vpop.xlane.xlu0 %203
    %v205 = vsel %vm64, %v185, 0.0
    %206 = vadd.xlane.f32.xlu0 %v205
    %v207 = vpop.xlane.xlu0 %206
    %v208 = vsel %vm64, %v186, 0.0
    %209 = vadd.xlane.f32.xlu0 %v208
    %v210 = vpop.xlane.xlu0 %209
    %v211 = vld [vmem:[#allocation2] sm:$0xff]
    %v212 = vld [vmem:[#allocation2 + $0x8] sm:$0xff]
    %v213 = vld [vmem:[#allocation2 + $0x10] sm:$0xff]
    %v214 = vld [vmem:[#allocation2 + $0x18] sm:$0xff]
    %v223 = vlaneseq
    %v224 = vand.u32 %v223, 127
    %v225 = vlaneseq
    %v226 = vshrl.u32 %v225, 7
    %v227 = vsub.s32 %v224, %v226
    %v228 = vrot.slane %v189, %v227
    %v229 = vadd.s32 %v224, 4294967288
    %v230 = vlaneseq
    %v231 = vshrl.u32 %v230, 7
    %v232 = vsub.s32 %v229, %v231
    %v233 = vrot.slane %v192, %v232
    %vm234 = vcmask 130112
    %v235 = vsel %vm234, %v233, %v228
    %v236 = vadd.s32 %v224, 4294967280
    %v237 = vlaneseq
    %v238 = vshrl.u32 %v237, 7
    %v239 = vsub.s32 %v236, %v238
    %v240 = vrot.slane %v195, %v239
    %vm241 = vcmask 195712
    %v242 = vsel %vm241, %v240, %v235
    %v243 = vadd.s32 %v224, 4294967272
    %v244 = vlaneseq
    %v245 = vshrl.u32 %v244, 7
    %v246 = vsub.s32 %v243, %v245
    %v247 = vrot.slane %v198, %v246
    %vm248 = vcmask 261312
    %v249 = vsel %vm248, %v247, %v242
    %v250 = vlaneseq
    %v251 = vshrl.u32 %v250, 7
    %v252 = vsub.s32 %v224, %v251
    %v253 = vrot.slane %v201, %v252
    %v254 = vlaneseq
    %v255 = vshrl.u32 %v254, 7
    %v256 = vsub.s32 %v229, %v255
    %v257 = vrot.slane %v204, %v256
    %v258 = vsel %vm234, %v257, %v253
    %v259 = vlaneseq
    %v260 = vshrl.u32 %v259, 7
    %v261 = vsub.s32 %v236, %v260
    %v262 = vrot.slane %v207, %v261
    %v263 = vsel %vm241, %v262, %v258
    %v264 = vlaneseq
    %v265 = vshrl.u32 %v264, 7
    %v266 = vsub.s32 %v243, %v265
    %v267 = vrot.slane %v210, %v266
    %v268 = vsel %vm248, %v267, %v263
    %vm269 = vcmask 1041409
    %v270 = vsel %vm269, %v268, %v249
    %v271 = vsel %vm64, %v270, 0
    %273 = vmatprep.subr.mxu0 0.0
    %274 = vmatpush1.msra.mxu0 0.0
    %275 = vmatprep.subr.mxu0 0.0
    %276 = vmatpush1.msra.mxu0 0.0
    %277 = vmatprep.subr.mxu0 0.0
    %278 = vmatpush1.msra.mxu0 0.0
    %279 = vmatprep.subr.mxu0 0.0
    %280 = vmatpush1.msra.mxu0 0.0
    %281 = vmatprep.subr.mxu0 0.0
    %282 = vmatpush1.msra.mxu0 0.0
    %283 = vmatprep.subr.mxu0 0.0
    %284 = vmatpush1.msra.mxu0 0.0
    %285 = vmatprep.subr.mxu0 0.0
    %286 = vmatpush1.msra.mxu0 0.0
    %287 = vmatprep.subr.mxu0 0.0
    %288 = vmatpush1.msra.mxu0 0.0
    %289 = vmatprep.subr.mxu0 0.0
    %290 = vmatpush1.msra.mxu0 0.0
    %291 = vmatprep.subr.mxu0 0.0
    %292 = vmatpush1.msra.mxu0 0.0
    %293 = vmatprep.subr.mxu0 0.0
    %294 = vmatpush1.msra.mxu0 0.0
    %295 = vmatprep.subr.mxu0 0.0
    %296 = vmatpush1.msra.mxu0 0.0
    %297 = vmatprep.subr.mxu0 0.0
    %298 = vmatpush1.msra.mxu0 %v214
    %299 = vmatprep.subr.mxu0 0.0
    %300 = vmatpush1.msra.mxu0 %v213
    %301 = vmatprep.subr.mxu0 0.0
    %302 = vmatpush1.msra.mxu0 %v212
    %303 = vmatprep.subr.mxu0 0.0
    %304 = vmatpush1.msra.mxu0 %v211
    %305 = vmatprep.subr.mxu0 0.0
    %306 = vmatpush2.msra.mxu0 0.0
    %307 = vmatprep.subr.mxu0 0.0
    %308 = vmatpush2.msra.mxu0 0.0
    %309 = vmatprep.subr.mxu0 0.0
    %310 = vmatpush2.msra.mxu0 0.0
    %311 = vmatprep.subr.mxu0 0.0
    %312 = vmatpush2.msra.mxu0 0.0
    %313 = vmatprep.subr.mxu0 0.0
    %314 = vmatpush2.msra.mxu0 0.0
    %315 = vmatprep.subr.mxu0 0.0
    %316 = vmatpush2.msra.mxu0 0.0
    %317 = vmatprep.subr.mxu0 0.0
    %318 = vmatpush2.msra.mxu0 0.0
    %319 = vmatprep.subr.mxu0 0.0
    %320 = vmatpush2.msra.mxu0 0.0
    %321 = vmatprep.subr.mxu0 0.0
    %322 = vmatpush2.msra.mxu0 0.0
    %323 = vmatprep.subr.mxu0 0.0
    %324 = vmatpush2.msra.mxu0 0.0
    %325 = vmatprep.subr.mxu0 0.0
    %326 = vmatpush2.msra.mxu0 0.0
    %327 = vmatprep.subr.mxu0 0.0
    %328 = vmatpush2.msra.mxu0 0.0
    %329 = vmatprep.subr.mxu0 0.0
    %330 = vmatpush2.msra.mxu0 0.0
    %331 = vmatprep.subr.mxu0 0.0
    %332 = vmatpush2.msra.mxu0 0.0
    %333 = vmatprep.subr.mxu0 0.0
    %334 = vmatpush2.msra.mxu0 0.0
    %335 = vmatprep.subr.mxu0 0.0
    %336 = vmatpush2.msra.mxu0 0.0
    %337 = vmatprep.mubr.f32.mxu0 0.0
    %338 = vmatmul.mubr.f32.gmra.mxu0 %v271
    %v339 = vpop.f32.mrf.mxu0
    %v340 = vadd.f32 0.0, %v339
    %v341 = vpop.f32.mrf.mxu0
    %342 = vdwg.mxu0
    %vm343 = vcmask 254976
    %344 = vst.msk [vmem:[#allocation8] sm:$0x3] %vm343, %v340
    // Predicated region
    $region30: #{tpu_custom_call.1} parent=1 // pred_check
      _
    $region31: #{tpu_custom_call.1} parent=1 // pred_check_branch
      %346 = sbr.rel (0) target = $region33
    $region32: #{tpu_custom_call.1} parent=1 // pred_region
      %s348 = ssub.s32 32, 32
      %349 = vsyncadd [#allocation4], %s348
      %s351 = sshll.u32 [#allocation8], 4
      %s352 = int_to_ptr.vmem [resolvable:$true] %s351
      %354 = dma.vmem_to_hbm [thread:$0]  %s352, 32, %s4, [#allocation4]
    $region33: #{tpu_custom_call.1} parent=1 // pred_fallthru
      _
    // Predicated region
    $region34: #{tpu_custom_call.1} parent=1 // pred_check
      _
    $region35: #{tpu_custom_call.1} parent=1 // pred_check_branch
      %356 = sbr.rel (0) target = $region37
    $region36: #{tpu_custom_call.1} parent=1 // pred_region
      %357 = dma.done [#allocation4], 32
    $region37: #{tpu_custom_call.1} parent=1 // pred_fallthru
      _
    %358 = vsyncpa [#allocation3], 1
    %359 = vsyncpa [#allocation6], 1
    %360 = vsyncpa [#allocation4], 1

</llo_original>
